<compile_context>
chip_gen: v6e
topology: v6e:2x2x1
jax: 0.10.0
libtpu: 0.0.40
codegen_flags: <defaults>
</compile_context>

<pallas_src>
import jax
import jax.numpy as jnp
from jax import lax
from jax.experimental import pallas as pl
from jax.experimental.pallas import tpu as pltpu

FEATURE_DIM = 128
NUM_HEADS = 8
HIDDEN_DIM = 4 * FEATURE_DIM
EPS = 1e-5  # nn.LayerNorm default

# rows of the stacked (8, 128) vector bundle
_ROW_B_ATT, _ROW_G1, _ROW_BE1, _ROW_BF2, _ROW_G2, _ROW_BE2 = range(6)


def _layernorm(x, gamma, beta):
    mu = jnp.mean(x, axis=-1, keepdims=True)
    var = jnp.mean((x - mu) ** 2, axis=-1, keepdims=True)
    return (x - mu) * lax.rsqrt(var + EPS) * gamma + beta


def fusion_kernel(cnn_ref, vit_ref, watt_ref, w1_ref, bf1_ref, w2_ref, vec_ref,
                  out_ref):
    cnn = cnn_ref[...]                       # (TB, D) f32
    vit = vit_ref[...]                       # (TB, D) f32

    b_att = vec_ref[_ROW_B_ATT]              # (D,)
    g1, be1 = vec_ref[_ROW_G1], vec_ref[_ROW_BE1]
    bf2 = vec_ref[_ROW_BF2]
    g2, be2 = vec_ref[_ROW_G2], vec_ref[_ROW_BE2]

    # ---- cross attention (seq_len == 1  =>  softmax == 1, folded to 1 matmul)
    attn = jnp.dot(vit.astype(watt_ref.dtype), watt_ref[...],
                   preferred_element_type=jnp.float32) + b_att

    # ---- residual + LayerNorm1 (f32 VPU path)
    x1 = _layernorm(cnn + attn, g1, be1)

    # ---- FFN: Linear -> ReLU -> Dropout(identity at eval) -> Linear
    h = jnp.maximum(
        jnp.dot(x1.astype(w1_ref.dtype), w1_ref[...],
                preferred_element_type=jnp.float32) + bf1_ref[...], 0.0)
    f = jnp.dot(h.astype(w2_ref.dtype), w2_ref[...],
                preferred_element_type=jnp.float32) + bf2

    # ---- residual + LayerNorm2
    out_ref[...] = _layernorm(x1 + f, g2, be2).astype(out_ref.dtype)


def prepare_params(p, matmul_dtype=jnp.float32):
    """One-time parameter preparation (transposes, attention folding, stacking).

    Do NOT call this per forward pass -- it hoists all wrapper-side reshapes and
    the algebraic fusion of (v_proj, out_proj) out of the hot path.
    Use matmul_dtype=jnp.bfloat16 on v6e/v7x for large batches.
    """
    D = FEATURE_DIM
    wo_t = p["wo"].T                                    # (D, D)
    w_att = (p["wv"].T @ wo_t)                          # (D, D): vit @ w_att == out_proj(v_proj(vit))
    b_att = p["bv"] @ wo_t + p["bo"]                    # (D,)

    vecs = jnp.zeros((8, D), jnp.float32)
    vecs = vecs.at[_ROW_B_ATT].set(b_att)
    vecs = vecs.at[_ROW_G1].set(p["g1"])
    vecs = vecs.at[_ROW_BE1].set(p["be1"])
    vecs = vecs.at[_ROW_BF2].set(p["bf2"])
    vecs = vecs.at[_ROW_G2].set(p["g2"])
    vecs = vecs.at[_ROW_BE2].set(p["be2"])

    return dict(
        w_att=w_att.astype(matmul_dtype),
        w1=p["w1"].T.astype(matmul_dtype),              # (D, 4D)
        bf1=p["bf1"][None, :].astype(jnp.float32),      # (1, 4D)
        w2=p["w2"].T.astype(matmul_dtype),              # (4D, D)
        vecs=vecs,                                      # (8, D) f32
    )


def cross_attention_fusion(cnn, vit, prep, *, tb=512):
    """Pallas forward.  cnn/vit: (B, D) float32, prep = prepare_params(params)."""
    B, D = cnn.shape
    assert D == FEATURE_DIM
    H = HIDDEN_DIM

    # Batch tile: at least 8 sublanes, at most `tb` rows per grid step.
    tb = min(tb, max(8, pl.cdiv(B, 8) * 8))
    Bp = pl.cdiv(B, tb) * tb
    if Bp != B:
        pad = Bp - B
        cnn = jnp.pad(cnn, ((0, pad), (0, 0)))
        vit = jnp.pad(vit, ((0, pad), (0, 0)))

    grid = (Bp // tb,)
    batch_spec = pl.BlockSpec((tb, D), lambda i: (i, 0))
    # Weights/biases: index_map always (0, 0) -> stay VMEM-resident across steps.
    resident = lambda shape: pl.BlockSpec(shape, lambda i: (0, 0))

    out = pl.pallas_call(
        fusion_kernel,
        out_shape=jax.ShapeDtypeStruct((Bp, D), jnp.float32),
        grid_spec=pltpu.PrefetchScalarGridSpec(
            num_scalar_prefetch=0,
            grid=grid,
            in_specs=[
                batch_spec,                 # cnn
                batch_spec,                 # vit
                resident((D, D)),           # w_att
                resident((D, H)),           # w1
                resident((1, H)),           # bf1
                resident((H, D)),           # w2
                resident((8, D)),           # stacked bias/gamma/beta bundle
            ],
            out_specs=batch_spec,
        ),
        compiler_params=pltpu.CompilerParams(
            dimension_semantics=("parallel",)),
    )(cnn, vit, prep["w_att"], prep["w1"], prep["bf1"], prep["w2"], prep["vecs"])

    return out[:B]


def init_params(key):
    """Deterministic synthetic parameters with the same shapes as the module."""
    D = FEATURE_DIM
    ks = jax.random.split(key, 12)

    def w(k, shape, scale=0.05):
        return scale * jax.random.normal(k, shape, jnp.float32)

    return dict(
        # MultiheadAttention: in_proj (3D, D) split into q/k/v, out_proj (D, D)
        wq=w(ks[0], (D, D)), wk=w(ks[1], (D, D)), wv=w(ks[2], (D, D)),
        bq=w(ks[3], (D,)), bk=w(ks[4], (D,)), bv=w(ks[5], (D,)),
        wo=w(ks[6], (D, D)), bo=w(ks[7], (D,)),
        # LayerNorms
        g1=jnp.ones((D,), jnp.float32), be1=jnp.zeros((D,), jnp.float32),
        g2=jnp.ones((D,), jnp.float32), be2=jnp.zeros((D,), jnp.float32),
        # FFN
        w1=w(ks[8], (4 * D, D)), bf1=w(ks[9], (4 * D,)),
        w2=w(ks[10], (D, 4 * D)), bf2=w(ks[11], (D,)),
    )


def reference(cnn, vit, p):
    """Pure-JAX reference of the PyTorch forward (eval mode)."""
    def ln(x, g, b):
        mu = x.mean(-1, keepdims=True)
        var = ((x - mu) ** 2).mean(-1, keepdims=True)
        return (x - mu) / jnp.sqrt(var + EPS) * g + b

    # seq_len == 1: softmax over the single key position is exactly 1
    v = vit @ p["wv"].T + p["bv"]
    attn = v @ p["wo"].T + p["bo"]
    x1 = ln(cnn + attn, p["g1"], p["be1"])
    h = jax.nn.relu(x1 @ p["w1"].T + p["bf1"])
    f = h @ p["w2"].T + p["bf2"]
    return ln(x1 + f, p["g2"], p["be2"])


if __name__ == "__main__":
    key = jax.random.PRNGKey(0)
    k_cnn, k_vit, k_par = jax.random.split(key, 3)

    B = 8
    cnn_features = jax.random.normal(k_cnn, (B, FEATURE_DIM), jnp.float32)
    vit_features = jax.random.normal(k_vit, (B, FEATURE_DIM), jnp.float32)
    params = init_params(k_par)

    # One-time param prep (f32 matmuls here; use jnp.bfloat16 on v6e/v7x at
    # larger batch for ~2x MXU throughput and half the weight DMA bytes).
    prep = prepare_params(params, matmul_dtype=jnp.float32)

    out = cross_attention_fusion(cnn_features, vit_features, prep)
    out = jax.block_until_ready(out)

    ref = reference(cnn_features, vit_features, params)
    assert out.shape == (B, FEATURE_DIM)
    assert jnp.allclose(out, ref, atol=1e-4, rtol=1e-4), float(jnp.abs(out - ref).max())

    print("KERNEL_OK")
</pallas_src>

<mosaic_0001>
module attributes {stable_mosaic.version = 11 : i64} {
  func.func @fusion_kernel(%arg0: i32, %arg1: memref<8x128xf32, #tpu.memory_space<vmem>>, %arg2: memref<8x128xf32, #tpu.memory_space<vmem>>, %arg3: memref<128x128xf32, #tpu.memory_space<vmem>>, %arg4: memref<128x512xf32, #tpu.memory_space<vmem>>, %arg5: memref<1x512xf32, #tpu.memory_space<vmem>>, %arg6: memref<512x128xf32, #tpu.memory_space<vmem>>, %arg7: memref<8x128xf32, #tpu.memory_space<vmem>>, %arg8: memref<8x128xf32, #tpu.memory_space<vmem>>) attributes {dimension_semantics = [#tpu.dimension_semantics<parallel>], iteration_bounds = array<i64: 1>, scalar_prefetch = 0 : i64, scratch_operands = 0 : i64, tpu.core_type = #tpu.core_type<tc>, window_params = [{transform_indices = @transform_0, window_bounds = array<i64: 8, 128>}, {transform_indices = @transform_1, window_bounds = array<i64: 8, 128>}, {pipeline_mode = #tpu.pipeline_mode<synchronous>, transform_indices = @transform_2, window_bounds = array<i64: 128, 128>}, {pipeline_mode = #tpu.pipeline_mode<synchronous>, transform_indices = @transform_3, window_bounds = array<i64: 128, 512>}, {pipeline_mode = #tpu.pipeline_mode<synchronous>, transform_indices = @transform_4, window_bounds = array<i64: 1, 512>}, {pipeline_mode = #tpu.pipeline_mode<synchronous>, transform_indices = @transform_5, window_bounds = array<i64: 512, 128>}, {pipeline_mode = #tpu.pipeline_mode<synchronous>, transform_indices = @transform_6, window_bounds = array<i64: 8, 128>}, {transform_indices = @transform_7, window_bounds = array<i64: 8, 128>}]} {
    %c0 = arith.constant 0 : index
    %c0_0 = arith.constant 0 : index
    %0 = vector.load %arg1[%c0, %c0_0] : memref<8x128xf32, #tpu.memory_space<vmem>>, vector<8x128xf32>
    %c0_1 = arith.constant 0 : index
    %c0_2 = arith.constant 0 : index
    %1 = vector.load %arg2[%c0_1, %c0_2] : memref<8x128xf32, #tpu.memory_space<vmem>>, vector<8x128xf32>
    %c0_3 = arith.constant 0 : index
    %c0_4 = arith.constant 0 : index
    %2 = vector.load %arg7[%c0_3, %c0_4] : memref<8x128xf32, #tpu.memory_space<vmem>>, vector<1x128xf32>
    %3 = vector.shape_cast %2 : vector<1x128xf32> to vector<128xf32>
    %c1 = arith.constant 1 : index
    %c0_5 = arith.constant 0 : index
    %4 = vector.load %arg7[%c1, %c0_5] : memref<8x128xf32, #tpu.memory_space<vmem>>, vector<1x128xf32>
    %5 = vector.shape_cast %4 : vector<1x128xf32> to vector<128xf32>
    %c2 = arith.constant 2 : index
    %c0_6 = arith.constant 0 : index
    %6 = vector.load %arg7[%c2, %c0_6] : memref<8x128xf32, #tpu.memory_space<vmem>>, vector<1x128xf32>
    %7 = vector.shape_cast %6 : vector<1x128xf32> to vector<128xf32>
    %c3 = arith.constant 3 : index
    %c0_7 = arith.constant 0 : index
    %8 = vector.load %arg7[%c3, %c0_7] : memref<8x128xf32, #tpu.memory_space<vmem>>, vector<1x128xf32>
    %9 = vector.shape_cast %8 : vector<1x128xf32> to vector<128xf32>
    %c4 = arith.constant 4 : index
    %c0_8 = arith.constant 0 : index
    %10 = vector.load %arg7[%c4, %c0_8] : memref<8x128xf32, #tpu.memory_space<vmem>>, vector<1x128xf32>
    %11 = vector.shape_cast %10 : vector<1x128xf32> to vector<128xf32>
    %c5 = arith.constant 5 : index
    %c0_9 = arith.constant 0 : index
    %12 = vector.load %arg7[%c5, %c0_9] : memref<8x128xf32, #tpu.memory_space<vmem>>, vector<1x128xf32>
    %13 = vector.shape_cast %12 : vector<1x128xf32> to vector<128xf32>
    %c0_10 = arith.constant 0 : index
    %c0_11 = arith.constant 0 : index
    %14 = vector.load %arg3[%c0_10, %c0_11] : memref<128x128xf32, #tpu.memory_space<vmem>>, vector<128x128xf32>
    %cst = arith.constant dense<0.000000e+00> : vector<8x128xf32>
    %15 = tpu.matmul %1, %14, %cst {dimension_numbers = #tpu.dot_dimension_numbers<[1], [0], [0], [1], [0, 0, 1, 1], [], []>} : vector<8x128xf32>, vector<128x128xf32>, vector<8x128xf32> -> vector<8x128xf32>
    %16 = vector.shape_cast %3 : vector<128xf32> to vector<1x128xf32>
    %17 = vector.broadcast %16 : vector<1x128xf32> to vector<8x128xf32>
    %18 = arith.addf %15, %17 : vector<8x128xf32>
    %19 = arith.addf %0, %18 : vector<8x128xf32>
    %cst_12 = arith.constant dense<0.000000e+00> : vector<8xf32>
    %20 = vector.multi_reduction <add>, %19, %cst_12 [1] : vector<8x128xf32> to vector<8xf32>
    %21 = vector.shape_cast %20 : vector<8xf32> to vector<8x1xf32>
    %cst_13 = arith.constant 1.280000e+02 : f32
    %22 = vector.broadcast %cst_13 : f32 to vector<8x1xf32>
    %23 = arith.divf %21, %22 : vector<8x1xf32>
    %24 = vector.broadcast %23 : vector<8x1xf32> to vector<8x128xf32>
    %25 = arith.subf %19, %24 : vector<8x128xf32>
    %26 = arith.mulf %25, %25 : vector<8x128xf32>
    %cst_14 = arith.constant dense<0.000000e+00> : vector<8xf32>
    %27 = vector.multi_reduction <add>, %26, %cst_14 [1] : vector<8x128xf32> to vector<8xf32>
    %28 = vector.shape_cast %27 : vector<8xf32> to vector<8x1xf32>
    %cst_15 = arith.constant 1.280000e+02 : f32
    %29 = vector.broadcast %cst_15 : f32 to vector<8x1xf32>
    %30 = arith.divf %28, %29 : vector<8x1xf32>
    %31 = vector.broadcast %23 : vector<8x1xf32> to vector<8x128xf32>
    %32 = arith.subf %19, %31 : vector<8x128xf32>
    %cst_16 = arith.constant 9.99999974E-6 : f32
    %33 = vector.broadcast %cst_16 : f32 to vector<8x1xf32>
    %34 = arith.addf %30, %33 : vector<8x1xf32>
    %35 = math.rsqrt %34 : vector<8x1xf32>
    %36 = vector.broadcast %35 : vector<8x1xf32> to vector<8x128xf32>
    %37 = arith.mulf %32, %36 : vector<8x128xf32>
    %38 = vector.shape_cast %5 : vector<128xf32> to vector<1x128xf32>
    %39 = vector.broadcast %38 : vector<1x128xf32> to vector<8x128xf32>
    %40 = arith.mulf %37, %39 : vector<8x128xf32>
    %41 = vector.shape_cast %7 : vector<128xf32> to vector<1x128xf32>
    %42 = vector.broadcast %41 : vector<1x128xf32> to vector<8x128xf32>
    %43 = arith.addf %40, %42 : vector<8x128xf32>
    %c0_17 = arith.constant 0 : index
    %c0_18 = arith.constant 0 : index
    %44 = vector.load %arg4[%c0_17, %c0_18] : memref<128x512xf32, #tpu.memory_space<vmem>>, vector<128x512xf32>
    %cst_19 = arith.constant dense<0.000000e+00> : vector<8x512xf32>
    %45 = tpu.matmul %43, %44, %cst_19 {dimension_numbers = #tpu.dot_dimension_numbers<[1], [0], [0], [1], [0, 0, 1, 1], [], []>} : vector<8x128xf32>, vector<128x512xf32>, vector<8x512xf32> -> vector<8x512xf32>
    %c0_20 = arith.constant 0 : index
    %c0_21 = arith.constant 0 : index
    %46 = vector.load %arg5[%c0_20, %c0_21] : memref<1x512xf32, #tpu.memory_space<vmem>>, vector<1x512xf32>
    %47 = vector.broadcast %46 : vector<1x512xf32> to vector<8x512xf32>
    %48 = arith.addf %45, %47 : vector<8x512xf32>
    %cst_22 = arith.constant 0.000000e+00 : f32
    %49 = vector.broadcast %cst_22 : f32 to vector<8x512xf32>
    %50 = arith.maximumf %48, %49 : vector<8x512xf32>
    %c0_23 = arith.constant 0 : index
    %c0_24 = arith.constant 0 : index
    %51 = vector.load %arg6[%c0_23, %c0_24] : memref<512x128xf32, #tpu.memory_space<vmem>>, vector<512x128xf32>
    %cst_25 = arith.constant dense<0.000000e+00> : vector<8x128xf32>
    %52 = tpu.matmul %50, %51, %cst_25 {dimension_numbers = #tpu.dot_dimension_numbers<[1], [0], [0], [1], [0, 0, 1, 1], [], []>} : vector<8x512xf32>, vector<512x128xf32>, vector<8x128xf32> -> vector<8x128xf32>
    %53 = vector.shape_cast %9 : vector<128xf32> to vector<1x128xf32>
    %54 = vector.broadcast %53 : vector<1x128xf32> to vector<8x128xf32>
    %55 = arith.addf %52, %54 : vector<8x128xf32>
    %56 = arith.addf %43, %55 : vector<8x128xf32>
    %cst_26 = arith.constant dense<0.000000e+00> : vector<8xf32>
    %57 = vector.multi_reduction <add>, %56, %cst_26 [1] : vector<8x128xf32> to vector<8xf32>
    %58 = vector.shape_cast %57 : vector<8xf32> to vector<8x1xf32>
    %cst_27 = arith.constant 1.280000e+02 : f32
    %59 = vector.broadcast %cst_27 : f32 to vector<8x1xf32>
    %60 = arith.divf %58, %59 : vector<8x1xf32>
    %61 = vector.broadcast %60 : vector<8x1xf32> to vector<8x128xf32>
    %62 = arith.subf %56, %61 : vector<8x128xf32>
    %63 = arith.mulf %62, %62 : vector<8x128xf32>
    %cst_28 = arith.constant dense<0.000000e+00> : vector<8xf32>
    %64 = vector.multi_reduction <add>, %63, %cst_28 [1] : vector<8x128xf32> to vector<8xf32>
    %65 = vector.shape_cast %64 : vector<8xf32> to vector<8x1xf32>
    %cst_29 = arith.constant 1.280000e+02 : f32
    %66 = vector.broadcast %cst_29 : f32 to vector<8x1xf32>
    %67 = arith.divf %65, %66 : vector<8x1xf32>
    %68 = vector.broadcast %60 : vector<8x1xf32> to vector<8x128xf32>
    %69 = arith.subf %56, %68 : vector<8x128xf32>
    %cst_30 = arith.constant 9.99999974E-6 : f32
    %70 = vector.broadcast %cst_30 : f32 to vector<8x1xf32>
    %71 = arith.addf %67, %70 : vector<8x1xf32>
    %72 = math.rsqrt %71 : vector<8x1xf32>
    %73 = vector.broadcast %72 : vector<8x1xf32> to vector<8x128xf32>
    %74 = arith.mulf %69, %73 : vector<8x128xf32>
    %75 = vector.shape_cast %11 : vector<128xf32> to vector<1x128xf32>
    %76 = vector.broadcast %75 : vector<1x128xf32> to vector<8x128xf32>
    %77 = arith.mulf %74, %76 : vector<8x128xf32>
    %78 = vector.shape_cast %13 : vector<128xf32> to vector<1x128xf32>
    %79 = vector.broadcast %78 : vector<1x128xf32> to vector<8x128xf32>
    %80 = arith.addf %77, %79 : vector<8x128xf32>
    %c0_31 = arith.constant 0 : index
    %c0_32 = arith.constant 0 : index
    %81 = vector.load %arg8[%c0_31, %c0_32] : memref<8x128xf32, #tpu.memory_space<vmem>>, vector<8x128xf32>
    tpu.vector_store %arg8[%c0_31, %c0_32], %80 {strides = array<i32>} : memref<8x128xf32, #tpu.memory_space<vmem>>, vector<8x128xf32>,
    return
  }
  func.func @transform_0(%arg0: i32) -> (i32, i32) {
    %c0_i32 = arith.constant 0 : i32
    %c0_i32_0 = arith.constant 0 : i32
    return %arg0, %c0_i32 : i32, i32
  }
  func.func @transform_1(%arg0: i32) -> (i32, i32) {
    %c0_i32 = arith.constant 0 : i32
    %c0_i32_0 = arith.constant 0 : i32
    return %arg0, %c0_i32 : i32, i32
  }
  func.func @transform_2(%arg0: i32) -> (i32, i32) {
    %c0_i32 = arith.constant 0 : i32
    %c0_i32_0 = arith.constant 0 : i32
    %c0_i32_1 = arith.constant 0 : i32
    return %c0_i32, %c0_i32_0 : i32, i32
  }
  func.func @transform_3(%arg0: i32) -> (i32, i32) {
    %c0_i32 = arith.constant 0 : i32
    %c0_i32_0 = arith.constant 0 : i32
    %c0_i32_1 = arith.constant 0 : i32
    return %c0_i32, %c0_i32_0 : i32, i32
  }
  func.func @transform_4(%arg0: i32) -> (i32, i32) {
    %c0_i32 = arith.constant 0 : i32
    %c0_i32_0 = arith.constant 0 : i32
    %c0_i32_1 = arith.constant 0 : i32
    return %c0_i32, %c0_i32_0 : i32, i32
  }
  func.func @transform_5(%arg0: i32) -> (i32, i32) {
    %c0_i32 = arith.constant 0 : i32
    %c0_i32_0 = arith.constant 0 : i32
    %c0_i32_1 = arith.constant 0 : i32
    return %c0_i32, %c0_i32_0 : i32, i32
  }
  func.func @transform_6(%arg0: i32) -> (i32, i32) {
    %c0_i32 = arith.constant 0 : i32
    %c0_i32_0 = arith.constant 0 : i32
    %c0_i32_1 = arith.constant 0 : i32
    return %c0_i32, %c0_i32_0 : i32, i32
  }
  func.func @transform_7(%arg0: i32) -> (i32, i32) {
    %c0_i32 = arith.constant 0 : i32
    %c0_i32_0 = arith.constant 0 : i32
    return %arg0, %c0_i32 : i32, i32
  }
}

</mosaic_0001>

<llo_original>
// kernel: tpu_custom_call.1
$region0: #{tpu_custom_call.1}
  #allocation0 [shape = 'u32[]', space=smem, size = 0x4, offset = 0x4, fixed_abs, tag = 'smem constant byte address 0x4 - core index']
  #allocation1 [shape = 'u32[144,128]{1,0:T(1,128)}', space=vmem, size = 0x12000, scoped, tag = 'internal scratch']
  %s0 = inlined_call_operand.hbm [shape: f32[8,128], index: 0, kind: input, shape index: {}]
  %s1 = inlined_call_operand.hbm [shape: f32[8,128], index: 1, kind: input, shape index: {}]
  %s2 = inlined_call_operand.hbm [shape: f32[128,128], index: 2, kind: input, shape index: {}]
  %s3 = inlined_call_operand.hbm [shape: f32[128,512], index: 3, kind: input, shape index: {}]
  %s4 = inlined_call_operand.hbm [shape: f32[1,512], index: 4, kind: input, shape index: {}]
  %s5 = inlined_call_operand.hbm [shape: f32[512,128], index: 5, kind: input, shape index: {}]
  %s6 = inlined_call_operand.vmem [shape: f32[8,128], index: 6, kind: input, shape index: {}]
  %s7 = inlined_call_operand.hbm [shape: f32[8,128], index: 7, kind: output, shape index: {}]
  %s8 = sld [smem:[#allocation0]]
  $region62: #{tpu_custom_call.1} parent=0
    _
  %s10 = ssub.s32 1, %s8
  %s11 = scalar_select 0, %s10, %s8
  $region1: #{tpu_custom_call.1} parent=0
    #allocation2 [shape = 'u8[4096]{0}', space=vmem, size = 0x1000, scoped, tag = 'input window, operand 0, single buffered']
    #allocation3 [shape = 's32[1]{0}', space=sflag, size = 0x4, scoped, tag = 'scoped memory for tpu_custom_call.1']
    #allocation4 [shape = 's32[1]{0}', space=sflag, size = 0x4, scoped, tag = 'scoped memory for tpu_custom_call.1']
    #allocation5 [shape = 'u8[4096]{0}', space=vmem, size = 0x1000, scoped, tag = 'input window, operand 1, single buffered']
    #allocation6 [shape = 's32[1]{0}', space=sflag, size = 0x4, scoped, tag = 'scoped memory for tpu_custom_call.1']
    #allocation7 [shape = 'u8[65536]{0}', space=vmem, size = 0x10000, scoped, tag = 'input window, operand 2, single buffered']
    #allocation8 [shape = 'u8[262144]{0}', space=vmem, size = 0x40000, scoped, tag = 'input window, operand 3, single buffered']
    #allocation9 [shape = 's32[1]{0}', space=sflag, size = 0x4, scoped, tag = 'scoped memory for tpu_custom_call.1']
    #allocation10 [shape = 'u8[2048]{0}', space=vmem, size = 0x800, scoped, tag = 'input window, operand 4, single buffered']
    #allocation11 [shape = 'u8[262144]{0}', space=vmem, size = 0x40000, scoped, tag = 'input window, operand 5, single buffered']
    #allocation12 [shape = 's32[1]{0}', space=sflag, size = 0x4, scoped, tag = 'scoped memory for tpu_custom_call.1']
    #allocation13 [shape = 'u8[4096]{0}', space=vmem, size = 0x1000, scoped, tag = 'output window, operand 0, single buffered']
    %12 = vsyncpa [#allocation3], 0
    %13 = vsyncpa [#allocation6], 0
    %14 = vsyncpa [#allocation9], 0
    %15 = vsyncpa [#allocation12], 0
    %16 = vsyncpa [#allocation4], 0
    // Predicated region
    $region2: #{tpu_custom_call.1} parent=1 // pred_check
      _
    $region3: #{tpu_custom_call.1} parent=1 // pred_check_branch
      %18 = sbr.rel (0) target = $region5
    $region4: #{tpu_custom_call.1} parent=1 // pred_region
      %s20 = ssub.s32 128, 128
      %21 = vsyncadd [#allocation3], %s20
      %s23 = sshll.u32 [#allocation2], 4
      %s24 = int_to_ptr.vmem [resolvable:$true] %s23
      %26 = dma.hbm_to_vmem [thread:$0]  %s0, 128, %s24, [#allocation3]
    $region5: #{tpu_custom_call.1} parent=1 // pred_fallthru
      _
    // Predicated region
    $region6: #{tpu_custom_call.1} parent=1 // pred_check
      _
    $region7: #{tpu_custom_call.1} parent=1 // pred_check_branch
      %28 = sbr.rel (0) target = $region9
    $region8: #{tpu_custom_call.1} parent=1 // pred_region
      %s30 = ssub.s32 128, 128
      %31 = vsyncadd [#allocation6], %s30
      %s33 = sshll.u32 [#allocation5], 4
      %s34 = int_to_ptr.vmem [resolvable:$true] %s33
      %36 = dma.hbm_to_vmem [thread:$0]  %s1, 128, %s34, [#allocation6]
    $region9: #{tpu_custom_call.1} parent=1 // pred_fallthru
      _
    // Predicated region
    $region10: #{tpu_custom_call.1} parent=1 // pred_check
      _
    $region11: #{tpu_custom_call.1} parent=1 // pred_check_branch
      %38 = sbr.rel (0) target = $region13
    $region12: #{tpu_custom_call.1} parent=1 // pred_region
      %s40 = ssub.s32 2048, 2048
      %41 = vsyncadd [#allocation6], %s40
      %s42 = sshll.u32 [#allocation7], 4
      %s43 = int_to_ptr.vmem [resolvable:$true] %s42
      %48 = dma.hbm_to_vmem [thread:$0]  %s2, 2048, %s43, [#allocation6], 128, 128, 8
    $region13: #{tpu_custom_call.1} parent=1 // pred_fallthru
      _
    // Predicated region
    $region14: #{tpu_custom_call.1} parent=1 // pred_check
      _
    $region15: #{tpu_custom_call.1} parent=1 // pred_check_branch
      %50 = sbr.rel (0) target = $region17
    $region16: #{tpu_custom_call.1} parent=1 // pred_region
      %s52 = ssub.s32 8192, 8192
      %53 = vsyncadd [#allocation9], %s52
      %s54 = sshll.u32 [#allocation8], 4
      %s55 = int_to_ptr.vmem [resolvable:$true] %s54
      %60 = dma.hbm_to_vmem [thread:$0]  %s3, 8192, %s55, [#allocation9], 512, 512, 32
    $region17: #{tpu_custom_call.1} parent=1 // pred_fallthru
      _
    // Predicated region
    $region18: #{tpu_custom_call.1} parent=1 // pred_check
      _
    $region19: #{tpu_custom_call.1} parent=1 // pred_check_branch
      %62 = sbr.rel (0) target = $region21
    $region20: #{tpu_custom_call.1} parent=1 // pred_region
      %s64 = ssub.s32 64, 64
      %65 = vsyncadd [#allocation9], %s64
      %s67 = sshll.u32 [#allocation10], 4
      %s68 = int_to_ptr.vmem [resolvable:$true] %s67
      %70 = dma.hbm_to_vmem [thread:$0]  %s4, 64, %s68, [#allocation9]
    $region21: #{tpu_custom_call.1} parent=1 // pred_fallthru
      _
    // Predicated region
    $region22: #{tpu_custom_call.1} parent=1 // pred_check
      _
    $region23: #{tpu_custom_call.1} parent=1 // pred_check_branch
      %72 = sbr.rel (0) target = $region25
    $region24: #{tpu_custom_call.1} parent=1 // pred_region
      %s74 = ssub.s32 8192, 8192
      %75 = vsyncadd [#allocation12], %s74
      %s76 = sshll.u32 [#allocation11], 4
      %s77 = int_to_ptr.vmem [resolvable:$true] %s76
      %82 = dma.hbm_to_vmem [thread:$0]  %s5, 8192, %s77, [#allocation12], 128, 128, 8
    $region25: #{tpu_custom_call.1} parent=1 // pred_fallthru
      _
    // Predicated region
    $region26: #{tpu_custom_call.1} parent=1 // pred_check
      _
    $region27: #{tpu_custom_call.1} parent=1 // pred_check_branch
      %84 = sbr.rel (0) target = $region29
    $region28: #{tpu_custom_call.1} parent=1 // pred_region
      _
    $region29: #{tpu_custom_call.1} parent=1 // pred_fallthru
      _
    // Predicated region
    $region30: #{tpu_custom_call.1} parent=1 // pred_check
      _
    $region31: #{tpu_custom_call.1} parent=1 // pred_check_branch
      %86 = sbr.rel (0) target = $region33
    $region32: #{tpu_custom_call.1} parent=1 // pred_region
      %87 = dma.done [#allocation3], 128
    $region33: #{tpu_custom_call.1} parent=1 // pred_fallthru
      _
    // Predicated region
    $region34: #{tpu_custom_call.1} parent=1 // pred_check
      _
    $region35: #{tpu_custom_call.1} parent=1 // pred_check_branch
      %89 = sbr.rel (0) target = $region37
    $region36: #{tpu_custom_call.1} parent=1 // pred_region
      %90 = dma.done [#allocation6], 128
    $region37: #{tpu_custom_call.1} parent=1 // pred_fallthru
      _
    // Predicated region
    $region38: #{tpu_custom_call.1} parent=1 // pred_check
      _
    $region39: #{tpu_custom_call.1} parent=1 // pred_check_branch
      %92 = sbr.rel (0) target = $region41
    $region40: #{tpu_custom_call.1} parent=1 // pred_region
      %93 = dma.done [#allocation6], 2048
    $region41: #{tpu_custom_call.1} parent=1 // pred_fallthru
      _
    // Predicated region
    $region42: #{tpu_custom_call.1} parent=1 // pred_check
      _
    $region43: #{tpu_custom_call.1} parent=1 // pred_check_branch
      %95 = sbr.rel (0) target = $region45
    $region44: #{tpu_custom_call.1} parent=1 // pred_region
      %96 = dma.done [#allocation9], 8192
    $region45: #{tpu_custom_call.1} parent=1 // pred_fallthru
      _
    // Predicated region
    $region46: #{tpu_custom_call.1} parent=1 // pred_check
      _
    $region47: #{tpu_custom_call.1} parent=1 // pred_check_branch
      %98 = sbr.rel (0) target = $region49
    $region48: #{tpu_custom_call.1} parent=1 // pred_region
      %99 = dma.done [#allocation9], 64
    $region49: #{tpu_custom_call.1} parent=1 // pred_fallthru
      _
    // Predicated region
    $region50: #{tpu_custom_call.1} parent=1 // pred_check
      _
    $region51: #{tpu_custom_call.1} parent=1 // pred_check_branch
      %101 = sbr.rel (0) target = $region53
    $region52: #{tpu_custom_call.1} parent=1 // pred_region
      %102 = dma.done [#allocation12], 8192
    $region53: #{tpu_custom_call.1} parent=1 // pred_fallthru
      _
    %v103 = vld [vmem:[#allocation2] sm:$0xff]
    %v104 = vld [vmem:[#allocation5] sm:$0xff]
    %v105 = vld [vmem:[%s6] sm:$0x1]
    %v106 = vld [vmem:[%s6 + $0x1] sm:$0x1]
    %v107 = vld [vmem:[%s6 + $0x2] sm:$0x1]
    %v108 = vld [vmem:[%s6 + $0x3] sm:$0x1]
    %v109 = vld [vmem:[%s6 + $0x4] sm:$0x1]
    %v110 = vld [vmem:[%s6 + $0x5] sm:$0x1]
    %v111 = vld [vmem:[#allocation7] sm:$0xff]
    %v112 = vld [vmem:[#allocation7 + $0x8] sm:$0xff]
    %v113 = vld [vmem:[#allocation7 + $0x10] sm:$0xff]
    %v114 = vld [vmem:[#allocation7 + $0x18] sm:$0xff]
    %v115 = vld [vmem:[#allocation7 + $0x20] sm:$0xff]
    %v116 = vld [vmem:[#allocation7 + $0x28] sm:$0xff]
    %v117 = vld [vmem:[#allocation7 + $0x30] sm:$0xff]
    %v118 = vld [vmem:[#allocation7 + $0x38] sm:$0xff]
    %v119 = vld [vmem:[#allocation7 + $0x40] sm:$0xff]
    %v120 = vld [vmem:[#allocation7 + $0x48] sm:$0xff]
    %v121 = vld [vmem:[#allocation7 + $0x50] sm:$0xff]
    %v122 = vld [vmem:[#allocation7 + $0x58] sm:$0xff]
    %v123 = vld [vmem:[#allocation7 + $0x60] sm:$0xff]
    %v124 = vld [vmem:[#allocation7 + $0x68] sm:$0xff]
    %v125 = vld [vmem:[#allocation7 + $0x70] sm:$0xff]
    %v126 = vld [vmem:[#allocation7 + $0x78] sm:$0xff]
    %v127 = vlaneseq
    %v128 = vshrl.u32 %v127, 7
    %v129 = vsub.s32 0, %v128
    %v130 = vrot.slane %v105, %v129
    %131 = vmatprep.subr.mxu0 0.0
    %132 = vmatpush1.msra.mxu0 %v126
    %133 = vmatprep.subr.mxu0 0.0
    %134 = vmatpush1.msra.mxu0 %v125
    %135 = vmatprep.subr.mxu0 0.0
    %136 = vmatpush1.msra.mxu0 %v124
    %137 = vmatprep.subr.mxu0 0.0
    %138 = vmatpush1.msra.mxu0 %v123
    %139 = vmatprep.subr.mxu0 0.0
    %140 = vmatpush1.msra.mxu0 %v122
    %141 = vmatprep.subr.mxu0 0.0
    %142 = vmatpush1.msra.mxu0 %v121
    %143 = vmatprep.subr.mxu0 0.0
    %144 = vmatpush1.msra.mxu0 %v120
    %145 = vmatprep.subr.mxu0 0.0
    %146 = vmatpush1.msra.mxu0 %v119
    %147 = vmatprep.subr.mxu0 0.0
    %148 = vmatpush1.msra.mxu0 %v118
    %149 = vmatprep.subr.mxu0 0.0
    %150 = vmatpush1.msra.mxu0 %v117
    %151 = vmatprep.subr.mxu0 0.0
    %152 = vmatpush1.msra.mxu0 %v116
    %153 = vmatprep.subr.mxu0 0.0
    %154 = vmatpush1.msra.mxu0 %v115
    %155 = vmatprep.subr.mxu0 0.0
    %156 = vmatpush1.msra.mxu0 %v114
    %157 = vmatprep.subr.mxu0 0.0
    %158 = vmatpush1.msra.mxu0 %v113
    %159 = vmatprep.subr.mxu0 0.0
    %160 = vmatpush1.msra.mxu0 %v112
    %161 = vmatprep.subr.mxu0 0.0
    %162 = vmatpush1.msra.mxu0 %v111
    %163 = vmatprep.subr.mxu0 0.0
    %164 = vmatpush2.msra.mxu0 0.0
    %165 = vmatprep.subr.mxu0 0.0
    %166 = vmatpush2.msra.mxu0 0.0
    %167 = vmatprep.subr.mxu0 0.0
    %168 = vmatpush2.msra.mxu0 0.0
    %169 = vmatprep.subr.mxu0 0.0
    %170 = vmatpush2.msra.mxu0 0.0
    %171 = vmatprep.subr.mxu0 0.0
    %172 = vmatpush2.msra.mxu0 0.0
    %173 = vmatprep.subr.mxu0 0.0
    %174 = vmatpush2.msra.mxu0 0.0
    %175 = vmatprep.subr.mxu0 0.0
    %176 = vmatpush2.msra.mxu0 0.0
    %177 = vmatprep.subr.mxu0 0.0
    %178 = vmatpush2.msra.mxu0 0.0
    %179 = vmatprep.subr.mxu0 0.0
    %180 = vmatpush2.msra.mxu0 0.0
    %181 = vmatprep.subr.mxu0 0.0
    %182 = vmatpush2.msra.mxu0 0.0
    %183 = vmatprep.subr.mxu0 0.0
    %184 = vmatpush2.msra.mxu0 0.0
    %185 = vmatprep.subr.mxu0 0.0
    %186 = vmatpush2.msra.mxu0 0.0
    %187 = vmatprep.subr.mxu0 0.0
    %188 = vmatpush2.msra.mxu0 0.0
    %189 = vmatprep.subr.mxu0 0.0
    %190 = vmatpush2.msra.mxu0 0.0
    %191 = vmatprep.subr.mxu0 0.0
    %192 = vmatpush2.msra.mxu0 0.0
    %193 = vmatprep.subr.mxu0 0.0
    %194 = vmatpush2.msra.mxu0 0.0
    %195 = vmatprep.mubr.f32.mxu0 0.0
    %196 = vmatmul.mubr.f32.gmra.mxu0 %v104
    %v197 = vpop.f32.mrf.mxu0
    %v198 = vadd.f32 %v130, %v197
    %v199 = vpop.f32.mrf.mxu0
    %200 = vdwg.mxu0
    %v201 = vadd.f32 %v103, %v198
    %202 = vadd.xlane.f32.xlu0 %v201
    %v203 = vpop.xlane.xlu0 %202
    %v204 = vrcp.pop 128.0
    %v205 = vmul.f32 %v203, %v204
    %v206 = vsub.f32 %v201, %v205
    %v207 = vmul.f32 %v206, %v206
    %208 = vadd.xlane.f32.xlu0 %v207
    %v209 = vpop.xlane.xlu0 %208
    %v210 = vmul.f32 %v209, %v204
    %v211 = vadd.f32 %v210, 1e-05
    %v212 = vrsqrt.pop %v211
    %v213 = vmul.f32 %v206, %v212
    %v214 = vlaneseq
    %v215 = vshrl.u32 %v214, 7
    %v216 = vsub.s32 0, %v215
    %v217 = vrot.slane %v106, %v216
    %v218 = vmul.f32 %v213, %v217
    %v219 = vlaneseq
    %v220 = vshrl.u32 %v219, 7
    %v221 = vsub.s32 0, %v220
    %v222 = vrot.slane %v107, %v221
    %v223 = vadd.f32 %v218, %v222
    %v224 = vld [vmem:[#allocation8] sm:$0xff]
    %v225 = vld [vmem:[#allocation8 + $0x8] sm:$0xff]
    %v226 = vld [vmem:[#allocation8 + $0x10] sm:$0xff]
    %v227 = vld [vmem:[#allocation8 + $0x18] sm:$0xff]
    %v228 = vld [vmem:[#allocation8 + $0x20] sm:$0xff]
    %v229 = vld [vmem:[#allocation8 + $0x28] sm:$0xff]
    %v230 = vld [vmem:[#allocation8 + $0x30] sm:$0xff]
    %v231 = vld [vmem:[#allocation8 + $0x38] sm:$0xff]
    %v232 = vld [vmem:[#allocation8 + $0x40] sm:$0xff]
    %v233 = vld [vmem:[#allocation8 + $0x48] sm:$0xff]
    %v234 = vld [vmem:[#allocation8 + $0x50] sm:$0xff]
    %v235 = vld [vmem:[#allocation8 + $0x58] sm:$0xff]
    %v236 = vld [vmem:[#allocation8 + $0x60] sm:$0xff]
    %v237 = vld [vmem:[#allocation8 + $0x68] sm:$0xff]
    %v238 = vld [vmem:[#allocation8 + $0x70] sm:$0xff]
    %v239 = vld [vmem:[#allocation8 + $0x78] sm:$0xff]
    %v240 = vld [vmem:[#allocation8 + $0x80] sm:$0xff]
    %v241 = vld [vmem:[#allocation8 + $0x88] sm:$0xff]
    %v242 = vld [vmem:[#allocation8 + $0x90] sm:$0xff]
    %v243 = vld [vmem:[#allocation8 + $0x98] sm:$0xff]
    %v244 = vld [vmem:[#allocation8 + $0xa0] sm:$0xff]
    %v245 = vld [vmem:[#allocation8 + $0xa8] sm:$0xff]
    %v246 = vld [vmem:[#allocation8 + $0xb0] sm:$0xff]
    %v247 = vld [vmem:[#allocation8 + $0xb8] sm:$0xff]
    %v248 = vld [vmem:[#allocation8 + $0xc0] sm:$0xff]
    %v249 = vld [vmem:[#allocation8 + $0xc8] sm:$0xff]
    %v250 = vld [vmem:[#allocation8 + $0xd0] sm:$0xff]
    %v251 = vld [vmem:[#allocation8 + $0xd8] sm:$0xff]
    %v252 = vld [vmem:[#allocation8 + $0xe0] sm:$0xff]
    %v253 = vld [vmem:[#allocation8 + $0xe8] sm:$0xff]
    %v254 = vld [vmem:[#allocation8 + $0xf0] sm:$0xff]
    %v255 = vld [vmem:[#allocation8 + $0xf8] sm:$0xff]
    %v256 = vld [vmem:[#allocation8 + $0x100] sm:$0xff]
    %v257 = vld [vmem:[#allocation8 + $0x108] sm:$0xff]
    %v258 = vld [vmem:[#allocation8 + $0x110] sm:$0xff]
    %v259 = vld [vmem:[#allocation8 + $0x118] sm:$0xff]
    %v260 = vld [vmem:[#allocation8 + $0x120] sm:$0xff]
    %v261 = vld [vmem:[#allocation8 + $0x128] sm:$0xff]
    %v262 = vld [vmem:[#allocation8 + $0x130] sm:$0xff]
    %v263 = vld [vmem:[#allocation8 + $0x138] sm:$0xff]
    %v264 = vld [vmem:[#allocation8 + $0x140] sm:$0xff]
    %v265 = vld [vmem:[#allocation8 + $0x148] sm:$0xff]
    %v266 = vld [vmem:[#allocation8 + $0x150] sm:$0xff]
    %v267 = vld [vmem:[#allocation8 + $0x158] sm:$0xff]
    %v268 = vld [vmem:[#allocation8 + $0x160] sm:$0xff]
    %v269 = vld [vmem:[#allocation8 + $0x168] sm:$0xff]
    %v270 = vld [vmem:[#allocation8 + $0x170] sm:$0xff]
    %v271 = vld [vmem:[#allocation8 + $0x178] sm:$0xff]
    %v272 = vld [vmem:[#allocation8 + $0x180] sm:$0xff]
    %v273 = vld [vmem:[#allocation8 + $0x188] sm:$0xff]
    %v274 = vld [vmem:[#allocation8 + $0x190] sm:$0xff]
    %v275 = vld [vmem:[#allocation8 + $0x198] sm:$0xff]
    %v276 = vld [vmem:[#allocation8 + $0x1a0] sm:$0xff]
    %v277 = vld [vmem:[#allocation8 + $0x1a8] sm:$0xff]
    %v278 = vld [vmem:[#allocation8 + $0x1b0] sm:$0xff]
    %v279 = vld [vmem:[#allocation8 + $0x1b8] sm:$0xff]
    %v280 = vld [vmem:[#allocation8 + $0x1c0] sm:$0xff]
    %v281 = vld [vmem:[#allocation8 + $0x1c8] sm:$0xff]
    %v282 = vld [vmem:[#allocation8 + $0x1d0] sm:$0xff]
    %v283 = vld [vmem:[#allocation8 + $0x1d8] sm:$0xff]
    %v284 = vld [vmem:[#allocation8 + $0x1e0] sm:$0xff]
    %v285 = vld [vmem:[#allocation8 + $0x1e8] sm:$0xff]
    %v286 = vld [vmem:[#allocation8 + $0x1f0] sm:$0xff]
    %v287 = vld [vmem:[#allocation8 + $0x1f8] sm:$0xff]
    %v288 = vld [vmem:[#allocation10] sm:$0xf]
    %v290 = vlaneseq
    %v291 = vshrl.u32 %v290, 7
    %v292 = vsub.s32 0, %v291
    %v293 = vrot.slane %v288, %v292
    %v294 = vlaneseq
    %v295 = vshrl.u32 %v294, 7
    %v296 = vsub.s32 1, %v295
    %v297 = vrot.slane %v288, %v296
    %v298 = vlaneseq
    %v299 = vshrl.u32 %v298, 7
    %v300 = vsub.s32 2, %v299
    %v301 = vrot.slane %v288, %v300
    %v302 = vlaneseq
    %v303 = vshrl.u32 %v302, 7
    %v304 = vsub.s32 3, %v303
    %v305 = vrot.slane %v288, %v304
    %310 = vmatprep.subr.mxu0 %v285
    %311 = vmatpush1.msra.mxu0 %v284
    %312 = vmatprep.subr.mxu0 %v281
    %313 = vmatpush1.msra.mxu0 %v280
    %314 = vmatprep.subr.mxu0 %v277
    %315 = vmatpush1.msra.mxu0 %v276
    %316 = vmatprep.subr.mxu0 %v273
    %317 = vmatpush1.msra.mxu0 %v272
    %318 = vmatprep.subr.mxu0 %v269
    %319 = vmatpush1.msra.mxu0 %v268
    %320 = vmatprep.subr.mxu0 %v265
    %321 = vmatpush1.msra.mxu0 %v264
    %322 = vmatprep.subr.mxu0 %v261
    %323 = vmatpush1.msra.mxu0 %v260
    %324 = vmatprep.subr.mxu0 %v257
    %325 = vmatpush1.msra.mxu0 %v256
    %326 = vmatprep.subr.mxu0 %v253
    %327 = vmatpush1.msra.mxu0 %v252
    %328 = vmatprep.subr.mxu0 %v249
    %329 = vmatpush1.msra.mxu0 %v248
    %330 = vmatprep.subr.mxu0 %v245
    %331 = vmatpush1.msra.mxu0 %v244
    %332 = vmatprep.subr.mxu0 %v241
    %333 = vmatpush1.msra.mxu0 %v240
    %334 = vmatprep.subr.mxu0 %v237
    %335 = vmatpush1.msra.mxu0 %v236
    %336 = vmatprep.subr.mxu0 %v233
    %337 = vmatpush1.msra.mxu0 %v232
    %338 = vmatprep.subr.mxu0 %v229
    %339 = vmatpush1.msra.mxu0 %v228
    %340 = vmatprep.subr.mxu0 %v225
    %341 = vmatpush1.msra.mxu0 %v224
    %342 = vmatprep.subr.mxu0 0.0
    %343 = vmatpush2.msra.mxu0 0.0
    %344 = vmatprep.subr.mxu0 0.0
    %345 = vmatpush2.msra.mxu0 0.0
    %346 = vmatprep.subr.mxu0 0.0
    %347 = vmatpush2.msra.mxu0 0.0
    %348 = vmatprep.subr.mxu0 0.0
    %349 = vmatpush2.msra.mxu0 0.0
    %350 = vmatprep.subr.mxu0 0.0
    %351 = vmatpush2.msra.mxu0 0.0
    %352 = vmatprep.subr.mxu0 0.0
    %353 = vmatpush2.msra.mxu0 0.0
    %354 = vmatprep.subr.mxu0 0.0
    %355 = vmatpush2.msra.mxu0 0.0
    %356 = vmatprep.subr.mxu0 0.0
    %357 = vmatpush2.msra.mxu0 0.0
    %358 = vmatprep.subr.mxu0 0.0
    %359 = vmatpush2.msra.mxu0 0.0
    %360 = vmatprep.subr.mxu0 0.0
    %361 = vmatpush2.msra.mxu0 0.0
    %362 = vmatprep.subr.mxu0 0.0
    %363 = vmatpush2.msra.mxu0 0.0
    %364 = vmatprep.subr.mxu0 0.0
    %365 = vmatpush2.msra.mxu0 0.0
    %366 = vmatprep.subr.mxu0 0.0
    %367 = vmatpush2.msra.mxu0 0.0
    %368 = vmatprep.subr.mxu0 0.0
    %369 = vmatpush2.msra.mxu0 0.0
    %370 = vmatprep.subr.mxu0 0.0
    %371 = vmatpush2.msra.mxu0 0.0
    %372 = vmatprep.subr.mxu0 0.0
    %373 = vmatpush2.msra.mxu0 0.0
    %374 = vmatprep.mubr.f32.mxu0 0.0
    %375 = vmatmul.mubr.f32.gmra.mxu0 %v223
    %v376 = vpop.f32.mrf.mxu0
    %v377 = vadd.f32 %v293, %v376
    %v378 = vpop.f32.mrf.mxu0
    %v379 = vadd.f32 %v297, %v378
    %380 = vdwg.mxu0
    %381 = vmatprep.subr.mxu0 %v287
    %382 = vmatpush1.msra.mxu0 %v286
    %383 = vmatprep.subr.mxu0 %v283
    %384 = vmatpush1.msra.mxu0 %v282
    %385 = vmatprep.subr.mxu0 %v279
    %386 = vmatpush1.msra.mxu0 %v278
    %387 = vmatprep.subr.mxu0 %v275
    %388 = vmatpush1.msra.mxu0 %v274
    %389 = vmatprep.subr.mxu0 %v271
    %390 = vmatpush1.msra.mxu0 %v270
    %391 = vmatprep.subr.mxu0 %v267
    %392 = vmatpush1.msra.mxu0 %v266
    %393 = vmatprep.subr.mxu0 %v263
    %394 = vmatpush1.msra.mxu0 %v262
    %395 = vmatprep.subr.mxu0 %v259
    %396 = vmatpush1.msra.mxu0 %v258
    %397 = vmatprep.subr.mxu0 %v255
    %398 = vmatpush1.msra.mxu0 %v254
    %399 = vmatprep.subr.mxu0 %v251
    %400 = vmatpush1.msra.mxu0 %v250
    %401 = vmatprep.subr.mxu0 %v247
    %402 = vmatpush1.msra.mxu0 %v246
    %403 = vmatprep.subr.mxu0 %v243
    %404 = vmatpush1.msra.mxu0 %v242
    %405 = vmatprep.subr.mxu0 %v239
    %406 = vmatpush1.msra.mxu0 %v238
    %407 = vmatprep.subr.mxu0 %v235
    %408 = vmatpush1.msra.mxu0 %v234
    %409 = vmatprep.subr.mxu0 %v231
    %410 = vmatpush1.msra.mxu0 %v230
    %411 = vmatprep.subr.mxu0 %v227
    %412 = vmatpush1.msra.mxu0 %v226
    %413 = vmatprep.subr.mxu0 0.0
    %414 = vmatpush2.msra.mxu0 0.0
    %415 = vmatprep.subr.mxu0 0.0
    %416 = vmatpush2.msra.mxu0 0.0
    %417 = vmatprep.subr.mxu0 0.0
    %418 = vmatpush2.msra.mxu0 0.0
    %419 = vmatprep.subr.mxu0 0.0
    %420 = vmatpush2.msra.mxu0 0.0
    %421 = vmatprep.subr.mxu0 0.0
    %422 = vmatpush2.msra.mxu0 0.0
    %423 = vmatprep.subr.mxu0 0.0
    %424 = vmatpush2.msra.mxu0 0.0
    %425 = vmatprep.subr.mxu0 0.0
    %426 = vmatpush2.msra.mxu0 0.0
    %427 = vmatprep.subr.mxu0 0.0
    %428 = vmatpush2.msra.mxu0 0.0
    %429 = vmatprep.subr.mxu0 0.0
    %430 = vmatpush2.msra.mxu0 0.0
    %431 = vmatprep.subr.mxu0 0.0
    %432 = vmatpush2.msra.mxu0 0.0
    %433 = vmatprep.subr.mxu0 0.0
    %434 = vmatpush2.msra.mxu0 0.0
    %435 = vmatprep.subr.mxu0 0.0
    %436 = vmatpush2.msra.mxu0 0.0
    %437 = vmatprep.subr.mxu0 0.0
    %438 = vmatpush2.msra.mxu0 0.0
    %439 = vmatprep.subr.mxu0 0.0
    %440 = vmatpush2.msra.mxu0 0.0
    %441 = vmatprep.subr.mxu0 0.0
    %442 = vmatpush2.msra.mxu0 0.0
    %443 = vmatprep.subr.mxu0 0.0
    %444 = vmatpush2.msra.mxu0 0.0
    %445 = vmatprep.mubr.f32.mxu0 0.0
    %446 = vmatmul.mubr.f32.gmra.mxu0 %v223
    %v447 = vpop.f32.mrf.mxu0
    %v448 = vadd.f32 %v301, %v447
    %v449 = vpop.f32.mrf.mxu0
    %v450 = vadd.f32 %v305, %v449
    %451 = vdwg.mxu0
    %v452 = vmax.f32 %v377, 0.0
    %v453 = vmax.f32 %v379, 0.0
    %v454 = vmax.f32 %v448, 0.0
    %v455 = vmax.f32 %v450, 0.0
    %v456 = vld [vmem:[#allocation11] sm:$0xff]
    %v457 = vld [vmem:[#allocation11 + $0x8] sm:$0xff]
    %v458 = vld [vmem:[#allocation11 + $0x10] sm:$0xff]
    %v459 = vld [vmem:[#allocation11 + $0x18] sm:$0xff]
    %v460 = vld [vmem:[#allocation11 + $0x20] sm:$0xff]
    %v461 = vld [vmem:[#allocation11 + $0x28] sm:$0xff]
    %v462 = vld [vmem:[#allocation11 + $0x30] sm:$0xff]
    %v463 = vld [vmem:[#allocation11 + $0x38] sm:$0xff]
    %v464 = vld [vmem:[#allocation11 + $0x40] sm:$0xff]
    %v465 = vld [vmem:[#allocation11 + $0x48] sm:$0xff]
    %v466 = vld [vmem:[#allocation11 + $0x50] sm:$0xff]
    %v467 = vld [vmem:[#allocation11 + $0x58] sm:$0xff]
    %v468 = vld [vmem:[#allocation11 + $0x60] sm:$0xff]
    %v469 = vld [vmem:[#allocation11 + $0x68] sm:$0xff]
    %v470 = vld [vmem:[#allocation11 + $0x70] sm:$0xff]
    %v471 = vld [vmem:[#allocation11 + $0x78] sm:$0xff]
    %v472 = vld [vmem:[#allocation11 + $0x80] sm:$0xff]
    %v473 = vld [vmem:[#allocation11 + $0x88] sm:$0xff]
    %v474 = vld [vmem:[#allocation11 + $0x90] sm:$0xff]
    %v475 = vld [vmem:[#allocation11 + $0x98] sm:$0xff]
    %v476 = vld [vmem:[#allocation11 + $0xa0] sm:$0xff]
    %v477 = vld [vmem:[#allocation11 + $0xa8] sm:$0xff]
    %v478 = vld [vmem:[#allocation11 + $0xb0] sm:$0xff]
    %v479 = vld [vmem:[#allocation11 + $0xb8] sm:$0xff]
    %v480 = vld [vmem:[#allocation11 + $0xc0] sm:$0xff]
    %v481 = vld [vmem:[#allocation11 + $0xc8] sm:$0xff]
    %v482 = vld [vmem:[#allocation11 + $0xd0] sm:$0xff]
    %v483 = vld [vmem:[#allocation11 + $0xd8] sm:$0xff]
    %v484 = vld [vmem:[#allocation11 + $0xe0] sm:$0xff]
    %v485 = vld [vmem:[#allocation11 + $0xe8] sm:$0xff]
    %v486 = vld [vmem:[#allocation11 + $0xf0] sm:$0xff]
    %v487 = vld [vmem:[#allocation11 + $0xf8] sm:$0xff]
    %v488 = vld [vmem:[#allocation11 + $0x100] sm:$0xff]
    %v489 = vld [vmem:[#allocation11 + $0x108] sm:$0xff]
    %v490 = vld [vmem:[#allocation11 + $0x110] sm:$0xff]
    %v491 = vld [vmem:[#allocation11 + $0x118] sm:$0xff]
    %v492 = vld [vmem:[#allocation11 + $0x120] sm:$0xff]
    %v493 = vld [vmem:[#allocation11 + $0x128] sm:$0xff]
    %v494 = vld [vmem:[#allocation11 + $0x130] sm:$0xff]
    %v495 = vld [vmem:[#allocation11 + $0x138] sm:$0xff]
    %v496 = vld [vmem:[#allocation11 + $0x140] sm:$0xff]
    %v497 = vld [vmem:[#allocation11 + $0x148] sm:$0xff]
    %v498 = vld [vmem:[#allocation11 + $0x150] sm:$0xff]
    %v499 = vld [vmem:[#allocation11 + $0x158] sm:$0xff]
    %v500 = vld [vmem:[#allocation11 + $0x160] sm:$0xff]
    %v501 = vld [vmem:[#allocation11 + $0x168] sm:$0xff]
    %v502 = vld [vmem:[#allocation11 + $0x170] sm:$0xff]
    %v503 = vld [vmem:[#allocation11 + $0x178] sm:$0xff]
    %v504 = vld [vmem:[#allocation11 + $0x180] sm:$0xff]
    %v505 = vld [vmem:[#allocation11 + $0x188] sm:$0xff]
    %v506 = vld [vmem:[#allocation11 + $0x190] sm:$0xff]
    %v507 = vld [vmem:[#allocation11 + $0x198] sm:$0xff]
    %v508 = vld [vmem:[#allocation11 + $0x1a0] sm:$0xff]
    %v509 = vld [vmem:[#allocation11 + $0x1a8] sm:$0xff]
    %v510 = vld [vmem:[#allocation11 + $0x1b0] sm:$0xff]
    %v511 = vld [vmem:[#allocation11 + $0x1b8] sm:$0xff]
    %v512 = vld [vmem:[#allocation11 + $0x1c0] sm:$0xff]
    %v513 = vld [vmem:[#allocation11 + $0x1c8] sm:$0xff]
    %v514 = vld [vmem:[#allocation11 + $0x1d0] sm:$0xff]
    %v515 = vld [vmem:[#allocation11 + $0x1d8] sm:$0xff]
    %v516 = vld [vmem:[#allocation11 + $0x1e0] sm:$0xff]
    %v517 = vld [vmem:[#allocation11 + $0x1e8] sm:$0xff]
    %v518 = vld [vmem:[#allocation11 + $0x1f0] sm:$0xff]
    %v519 = vld [vmem:[#allocation11 + $0x1f8] sm:$0xff]
    %v520 = vlaneseq
    %v521 = vshrl.u32 %v520, 7
    %v522 = vsub.s32 0, %v521
    %v523 = vrot.slane %v108, %v522
    %524 = vmatprep.subr.mxu0 0.0
    %525 = vmatpush1.msra.mxu0 %v471
    %526 = vmatprep.subr.mxu0 0.0
    %527 = vmatpush1.msra.mxu0 %v470
    %528 = vmatprep.subr.mxu0 0.0
    %529 = vmatpush1.msra.mxu0 %v469
    %530 = vmatprep.subr.mxu0 0.0
    %531 = vmatpush1.msra.mxu0 %v468
    %532 = vmatprep.subr.mxu0 0.0
    %533 = vmatpush1.msra.mxu0 %v467
    %534 = vmatprep.subr.mxu0 0.0
    %535 = vmatpush1.msra.mxu0 %v466
    %536 = vmatprep.subr.mxu0 0.0
    %537 = vmatpush1.msra.mxu0 %v465
    %538 = vmatprep.subr.mxu0 0.0
    %539 = vmatpush1.msra.mxu0 %v464
    %540 = vmatprep.subr.mxu0 0.0
    %541 = vmatpush1.msra.mxu0 %v463
    %542 = vmatprep.subr.mxu0 0.0
    %543 = vmatpush1.msra.mxu0 %v462
    %544 = vmatprep.subr.mxu0 0.0
    %545 = vmatpush1.msra.mxu0 %v461
    %546 = vmatprep.subr.mxu0 0.0
    %547 = vmatpush1.msra.mxu0 %v460
    %548 = vmatprep.subr.mxu0 0.0
    %549 = vmatpush1.msra.mxu0 %v459
    %550 = vmatprep.subr.mxu0 0.0
    %551 = vmatpush1.msra.mxu0 %v458
    %552 = vmatprep.subr.mxu0 0.0
    %553 = vmatpush1.msra.mxu0 %v457
    %554 = vmatprep.subr.mxu0 0.0
    %555 = vmatpush1.msra.mxu0 %v456
    %556 = vmatprep.subr.mxu0 0.0
    %557 = vmatpush2.msra.mxu0 %v487
    %558 = vmatprep.subr.mxu0 0.0
    %559 = vmatpush2.msra.mxu0 %v486
    %560 = vmatprep.subr.mxu0 0.0
    %561 = vmatpush2.msra.mxu0 %v485
    %562 = vmatprep.subr.mxu0 0.0
    %563 = vmatpush2.msra.mxu0 %v484
    %564 = vmatprep.subr.mxu0 0.0
    %565 = vmatpush2.msra.mxu0 %v483
    %566 = vmatprep.subr.mxu0 0.0
    %567 = vmatpush2.msra.mxu0 %v482
    %568 = vmatprep.subr.mxu0 0.0
    %569 = vmatpush2.msra.mxu0 %v481
    %570 = vmatprep.subr.mxu0 0.0
    %571 = vmatpush2.msra.mxu0 %v480
    %572 = vmatprep.subr.mxu0 0.0
    %573 = vmatpush2.msra.mxu0 %v479
    %574 = vmatprep.subr.mxu0 0.0
    %575 = vmatpush2.msra.mxu0 %v478
    %576 = vmatprep.subr.mxu0 0.0
    %577 = vmatpush2.msra.mxu0 %v477
    %578 = vmatprep.subr.mxu0 0.0
    %579 = vmatpush2.msra.mxu0 %v476
    %580 = vmatprep.subr.mxu0 0.0
    %581 = vmatpush2.msra.mxu0 %v475
    %582 = vmatprep.subr.mxu0 0.0
    %583 = vmatpush2.msra.mxu0 %v474
    %584 = vmatprep.subr.mxu0 0.0
    %585 = vmatpush2.msra.mxu0 %v473
    %586 = vmatprep.subr.mxu0 0.0
    %587 = vmatpush2.msra.mxu0 %v472
    %588 = vmatprep.mubr.f32.mxu0 %v453
    %589 = vmatmul.mubr.f32.gmra.mxu0 %v452
    %v590 = vpop.f32.mrf.mxu0
    %v591 = vadd.f32 %v523, %v590
    %v592 = vpop.f32.mrf.mxu0
    %593 = vdwg.mxu0
    %594 = vmatprep.subr.mxu0 0.0
    %595 = vmatpush1.msra.mxu0 %v503
    %596 = vmatprep.subr.mxu0 0.0
    %597 = vmatpush1.msra.mxu0 %v502
    %598 = vmatprep.subr.mxu0 0.0
    %599 = vmatpush1.msra.mxu0 %v501
    %600 = vmatprep.subr.mxu0 0.0
    %601 = vmatpush1.msra.mxu0 %v500
    %602 = vmatprep.subr.mxu0 0.0
    %603 = vmatpush1.msra.mxu0 %v499
    %604 = vmatprep.subr.mxu0 0.0
    %605 = vmatpush1.msra.mxu0 %v498
    %606 = vmatprep.subr.mxu0 0.0
    %607 = vmatpush1.msra.mxu0 %v497
    %608 = vmatprep.subr.mxu0 0.0
    %609 = vmatpush1.msra.mxu0 %v496
    %610 = vmatprep.subr.mxu0 0.0
    %611 = vmatpush1.msra.mxu0 %v495
    %612 = vmatprep.subr.mxu0 0.0
    %613 = vmatpush1.msra.mxu0 %v494
    %614 = vmatprep.subr.mxu0 0.0
    %615 = vmatpush1.msra.mxu0 %v493
    %616 = vmatprep.subr.mxu0 0.0
    %617 = vmatpush1.msra.mxu0 %v492
    %618 = vmatprep.subr.mxu0 0.0
    %619 = vmatpush1.msra.mxu0 %v491
    %620 = vmatprep.subr.mxu0 0.0
    %621 = vmatpush1.msra.mxu0 %v490
    %622 = vmatprep.subr.mxu0 0.0
    %623 = vmatpush1.msra.mxu0 %v489
    %624 = vmatprep.subr.mxu0 0.0
    %625 = vmatpush1.msra.mxu0 %v488
    %626 = vmatprep.subr.mxu0 0.0
    %627 = vmatpush2.msra.mxu0 %v519
    %628 = vmatprep.subr.mxu0 0.0
    %629 = vmatpush2.msra.mxu0 %v518
    %630 = vmatprep.subr.mxu0 0.0
    %631 = vmatpush2.msra.mxu0 %v517
    %632 = vmatprep.subr.mxu0 0.0
    %633 = vmatpush2.msra.mxu0 %v516
    %634 = vmatprep.subr.mxu0 0.0
    %635 = vmatpush2.msra.mxu0 %v515
    %636 = vmatprep.subr.mxu0 0.0
    %637 = vmatpush2.msra.mxu0 %v514
    %638 = vmatprep.subr.mxu0 0.0
    %639 = vmatpush2.msra.mxu0 %v513
    %640 = vmatprep.subr.mxu0 0.0
    %641 = vmatpush2.msra.mxu0 %v512
    %642 = vmatprep.subr.mxu0 0.0
    %643 = vmatpush2.msra.mxu0 %v511
    %644 = vmatprep.subr.mxu0 0.0
    %645 = vmatpush2.msra.mxu0 %v510
    %646 = vmatprep.subr.mxu0 0.0
    %647 = vmatpush2.msra.mxu0 %v509
    %648 = vmatprep.subr.mxu0 0.0
    %649 = vmatpush2.msra.mxu0 %v508
    %650 = vmatprep.subr.mxu0 0.0
    %651 = vmatpush2.msra.mxu0 %v507
    %652 = vmatprep.subr.mxu0 0.0
    %653 = vmatpush2.msra.mxu0 %v506
    %654 = vmatprep.subr.mxu0 0.0
    %655 = vmatpush2.msra.mxu0 %v505
    %656 = vmatprep.subr.mxu0 0.0
    %657 = vmatpush2.msra.mxu0 %v504
    %658 = vmatprep.mubr.f32.mxu0 %v455
    %659 = vmatmul.mubr.f32.gmra.mxu0 %v454
    %v660 = vpop.f32.mrf.mxu0
    %v661 = vadd.f32 %v591, %v660
    %v662 = vpop.f32.mrf.mxu0
    %663 = vdwg.mxu0
    %v664 = vadd.f32 %v223, %v661
    %665 = vadd.xlane.f32.xlu0 %v664
    %v666 = vpop.xlane.xlu0 %665
    %v667 = vmul.f32 %v666, %v204
    %v668 = vsub.f32 %v664, %v667
    %v669 = vmul.f32 %v668, %v668
    %670 = vadd.xlane.f32.xlu0 %v669
    %v671 = vpop.xlane.xlu0 %670
    %v672 = vmul.f32 %v671, %v204
    %v673 = vadd.f32 %v672, 1e-05
    %v674 = vrsqrt.pop %v673
    %v675 = vmul.f32 %v668, %v674
    %v676 = vlaneseq
    %v677 = vshrl.u32 %v676, 7
    %v678 = vsub.s32 0, %v677
    %v679 = vrot.slane %v109, %v678
    %v680 = vmul.f32 %v675, %v679
    %v681 = vlaneseq
    %v682 = vshrl.u32 %v681, 7
    %v683 = vsub.s32 0, %v682
    %v684 = vrot.slane %v110, %v683
    %v685 = vadd.f32 %v680, %v684
    %686 = vst [vmem:[#allocation13] sm:$0xff] %v685
    // Predicated region
    $region54: #{tpu_custom_call.1} parent=1 // pred_check
      _
    $region55: #{tpu_custom_call.1} parent=1 // pred_check_branch
      %688 = sbr.rel (0) target = $region57
    $region56: #{tpu_custom_call.1} parent=1 // pred_region
      %s690 = ssub.s32 128, 128
      %691 = vsyncadd [#allocation4], %s690
      %s693 = sshll.u32 [#allocation13], 4
      %s694 = int_to_ptr.vmem [resolvable:$true] %s693
      %696 = dma.vmem_to_hbm [thread:$0]  %s694, 128, %s7, [#allocation4]
    $region57: #{tpu_custom_call.1} parent=1 // pred_fallthru
      _
    // Predicated region
    $region58: #{tpu_custom_call.1} parent=1 // pred_check
      _
    $region59: #{tpu_custom_call.1} parent=1 // pred_check_branch
      %698 = sbr.rel (0) target = $region61
    $region60: #{tpu_custom_call.1} parent=1 // pred_region
      %699 = dma.done [#allocation4], 128
    $region61: #{tpu_custom_call.1} parent=1 // pred_fallthru
      _
    %700 = vsyncpa [#allocation3], 1
    %701 = vsyncpa [#allocation6], 1
    %702 = vsyncpa [#allocation9], 1
    %703 = vsyncpa [#allocation12], 1
    %704 = vsyncpa [#allocation4], 1

</llo_original>
